<compile_context>
chip_gen: v7x
topology: tpu7x:2x2x1
jax: 0.10.0
libtpu: 0.0.40
codegen_flags: <defaults>
</compile_context>

<pallas_src>
import functools

import jax
import jax.numpy as jnp
from jax.experimental import pallas as pl
from jax.experimental.pallas import tpu as pltpu


# --------------------------------------------------------------------------
# Kernels
# --------------------------------------------------------------------------
def _se_fused_kernel(x_ref, w1_ref, b1_ref, w2_ref, b2_ref, out_ref):
    """Single-pass path: one (NB, c, hw) slab per grid step."""
    x = x_ref[...]                                               # (NB, c, hw)
    # Squeeze: spatial sum in f32 (the 1/(h*w) factor is folded into w1).
    pooled = jnp.sum(x.astype(jnp.float32), axis=2)              # (NB, c)
    # Excitation MLP: Linear -> ReLU -> Linear -> Sigmoid.
    h1 = jnp.dot(pooled, w1_ref[...],
                 preferred_element_type=jnp.float32) + b1_ref[...]
    h1 = jnp.maximum(h1, 0.0)
    h2 = jnp.dot(h1, w2_ref[...],
                 preferred_element_type=jnp.float32) + b2_ref[...]
    scale = jax.nn.sigmoid(h2)                                   # (NB, c) f32
    # Channel-wise rescale in the input's native dtype (bf16-native on v6e/v7x).
    out_ref[...] = (x * scale.astype(x.dtype)[:, :, None]).astype(out_ref.dtype)


def _se_pool_kernel(x_ref, w1_ref, b1_ref, w2_ref, b2_ref, scale_ref, *, hw, thw):
    """Two-pass fallback, pass 1: hw-tiled pooled sum + excitation MLP."""
    t = pl.program_id(1)

    @pl.when(t == 0)
    def _():
        scale_ref[...] = jnp.zeros_like(scale_ref)

    x = x_ref[...]                                               # (1, c, thw)
    # Mask the tail of a partial last hw tile (VMEM beyond the logical extent
    # of a partial input block is undefined).
    col = jax.lax.broadcasted_iota(jnp.int32, x.shape, 2) + t * thw
    xf = jnp.where(col < hw, x.astype(jnp.float32), 0.0)
    scale_ref[...] += jnp.sum(xf, axis=2)[:, None, :]            # (1, 1, c)

    @pl.when(t == pl.num_programs(1) - 1)
    def _():
        pooled = scale_ref[:, 0, :]                              # (1, c)
        h1 = jnp.dot(pooled, w1_ref[...],
                     preferred_element_type=jnp.float32) + b1_ref[...]
        h1 = jnp.maximum(h1, 0.0)
        h2 = jnp.dot(h1, w2_ref[...],
                     preferred_element_type=jnp.float32) + b2_ref[...]
        scale_ref[...] = jax.nn.sigmoid(h2)[:, None, :]


def _se_rescale_kernel(x_ref, scale_ref, out_ref):
    """Two-pass fallback, pass 2: hw-tiled channel rescale."""
    x = x_ref[...]                                               # (1, c, thw)
    s = scale_ref[:, 0, :].astype(x.dtype)                       # (1, c)
    out_ref[...] = (x * s[:, :, None]).astype(out_ref.dtype)


# --------------------------------------------------------------------------
# Wrapper
# --------------------------------------------------------------------------
def _vmem_limit_bytes():
    try:
        cap = int(pltpu.get_tpu_info().vmem_capacity_bytes)
    except Exception:
        cap = 64 << 20          # conservative: v7x per-TensorCore VMEM
    return (cap * 3) // 4


def _pick_nb(b, slab_bytes, weight_bytes, budget):
    """Largest NB (divisor of b, <= 8) whose double-buffered in+out blocks fit.

    Prefers choices that leave >= 2 grid steps (so both v7x TCs get work).
    Returns 0 if even NB=1 does not fit -> caller uses the two-pass fallback.
    """
    fitting = [n for n in range(1, min(b, 8) + 1)
               if b % n == 0 and 4 * n * slab_bytes + weight_bytes <= budget]
    if not fitting:
        return 0
    multi = [n for n in fitting if b // n >= 2]
    return max(multi) if multi else max(fitting)


def se_block(x, w1, b1, w2, b2, *, force_two_pass=False, hw_tile=None):
    """SE block forward. x: (b, c, h, w); w1: (hid, c); b1: (hid,);
    w2: (c, hid); b2: (c,)."""
    b, c, h, w = x.shape
    hid = w1.shape[0]
    hw = h * w
    itemsize = jnp.dtype(x.dtype).itemsize

    # Lane-dense (b, c, h*w) view — free reshape of contiguous NCHW, no pad.
    x2 = x.reshape(b, c, hw)

    # torch Linear is y = x @ W.T + b; pre-transpose once and fold the 1/(h*w)
    # of the average pool into the first layer's weights.
    w1t = jnp.asarray(w1, jnp.float32).T * (1.0 / hw)            # (c, hid)
    w2t = jnp.asarray(w2, jnp.float32).T                         # (hid, c)
    b1r = jnp.asarray(b1, jnp.float32).reshape(1, hid)
    b2r = jnp.asarray(b2, jnp.float32).reshape(1, c)

    vmem_limit = _vmem_limit_bytes()
    weight_bytes = 4 * int(w1t.size + w2t.size + b1r.size + b2r.size)
    slab_bytes = c * hw * itemsize
    nb = 0 if force_two_pass else _pick_nb(b, slab_bytes, weight_bytes,
                                           vmem_limit // 2)

    # ---------------- single-pass fused path ----------------
    if nb > 0:
        out = pl.pallas_call(
            _se_fused_kernel,
            out_shape=jax.ShapeDtypeStruct((b, c, hw), x.dtype),
            grid=(b // nb,),
            in_specs=[
                pl.BlockSpec((nb, c, hw), lambda i: (i, 0, 0)),
                pl.BlockSpec(w1t.shape, lambda i: (0, 0)),       # resident
                pl.BlockSpec(b1r.shape, lambda i: (0, 0)),
                pl.BlockSpec(w2t.shape, lambda i: (0, 0)),
                pl.BlockSpec(b2r.shape, lambda i: (0, 0)),
            ],
            out_specs=pl.BlockSpec((nb, c, hw), lambda i: (i, 0, 0)),
            compiler_params=pltpu.CompilerParams(
                dimension_semantics=("parallel",),
                vmem_limit_bytes=vmem_limit,
            ),
            cost_estimate=pl.CostEstimate(
                flops=2 * b * c * hw + 4 * b * c * hid,
                transcendentals=b * c,
                bytes_accessed=2 * b * c * hw * itemsize + weight_bytes,
            ),
        )(x2, w1t, b1r, w2t, b2r)
        return out.reshape(b, c, h, w)

    # ---------------- two-pass tiled fallback (slab > VMEM budget) ----------
    if hw_tile is not None:
        thw = min(int(hw_tile), hw)
    else:
        thw = ((vmem_limit // 2) // (4 * c * itemsize)) // 128 * 128
        thw = max(128, thw)
    if thw >= hw:
        thw = hw                                   # full-extent last dim
    else:
        thw = max(128, (thw // 128) * 128)         # keep lane alignment
    n_t = pl.cdiv(hw, thw)

    pool_kernel = functools.partial(_se_pool_kernel, hw=hw, thw=thw)
    scale = pl.pallas_call(
        pool_kernel,
        out_shape=jax.ShapeDtypeStruct((b, 1, c), jnp.float32),
        grid=(b, n_t),
        in_specs=[
            pl.BlockSpec((1, c, thw), lambda i, t: (i, 0, t)),
            pl.BlockSpec(w1t.shape, lambda i, t: (0, 0)),
            pl.BlockSpec(b1r.shape, lambda i, t: (0, 0)),
            pl.BlockSpec(w2t.shape, lambda i, t: (0, 0)),
            pl.BlockSpec(b2r.shape, lambda i, t: (0, 0)),
        ],
        out_specs=pl.BlockSpec((1, 1, c), lambda i, t: (i, 0, 0)),
        compiler_params=pltpu.CompilerParams(
            dimension_semantics=("parallel", "arbitrary"),
            vmem_limit_bytes=vmem_limit,
        ),
        cost_estimate=pl.CostEstimate(
            flops=b * c * hw + 4 * b * c * hid,
            transcendentals=b * c,
            bytes_accessed=b * c * hw * itemsize + weight_bytes + 4 * b * c,
        ),
    )(x2, w1t, b1r, w2t, b2r)

    out = pl.pallas_call(
        _se_rescale_kernel,
        out_shape=jax.ShapeDtypeStruct((b, c, hw), x.dtype),
        grid=(b, n_t),
        in_specs=[
            pl.BlockSpec((1, c, thw), lambda i, t: (i, 0, t)),
            pl.BlockSpec((1, 1, c), lambda i, t: (i, 0, 0)),
        ],
        out_specs=pl.BlockSpec((1, c, thw), lambda i, t: (i, 0, t)),
        compiler_params=pltpu.CompilerParams(
            dimension_semantics=("parallel", "parallel"),
            vmem_limit_bytes=vmem_limit,
        ),
        cost_estimate=pl.CostEstimate(
            flops=b * c * hw,
            transcendentals=0,
            bytes_accessed=2 * b * c * hw * itemsize + 4 * b * c,
        ),
    )(x2, scale)
    return out.reshape(b, c, h, w)


# --------------------------------------------------------------------------
# Plain-JAX reference (mirrors the PyTorch module)
# --------------------------------------------------------------------------
def se_block_ref(x, w1, b1, w2, b2):
    pooled = jnp.mean(x.astype(jnp.float32), axis=(2, 3))
    h1 = jnp.maximum(pooled @ jnp.asarray(w1, jnp.float32).T + b1, 0.0)
    scale = jax.nn.sigmoid(h1 @ jnp.asarray(w2, jnp.float32).T + b2)
    return (x.astype(jnp.float32) * scale[:, :, None, None]).astype(x.dtype)


if __name__ == "__main__":
    def make_inputs(key, batch, channels, spatial, ratio):
        hidden = max(channels // ratio, 1)
        kx, kw1, kb1, kw2, kb2 = jax.random.split(key, 5)
        x = jax.random.normal(kx, (batch, channels, spatial, spatial), jnp.float32)
        w1 = jax.random.normal(kw1, (hidden, channels), jnp.float32) * 0.5
        b1 = jax.random.normal(kb1, (hidden,), jnp.float32) * 0.1
        w2 = jax.random.normal(kw2, (channels, hidden), jnp.float32) * 0.5
        b2 = jax.random.normal(kb2, (channels,), jnp.float32) * 0.1
        return x, w1, b1, w2, b2

    key = jax.random.PRNGKey(0)
    k1, k2 = jax.random.split(key)

    # 1) Fused single-pass path, 128-aligned spatial (in_channel=4, ratio=2).
    x, w1, b1, w2, b2 = make_inputs(k1, 2, 4, 16, 2)
    out = jax.block_until_ready(se_block(x, w1, b1, w2, b2))
    ref = se_block_ref(x, w1, b1, w2, b2)
    assert out.shape == x.shape and out.dtype == x.dtype
    assert jnp.allclose(out, ref, atol=1e-5, rtol=1e-5)

    # 2) Fused path with a non-128-multiple spatial extent (hw = 144).
    x, w1, b1, w2, b2 = make_inputs(k2, 2, 8, 12, 2)
    out = jax.block_until_ready(se_block(x, w1, b1, w2, b2))
    ref = se_block_ref(x, w1, b1, w2, b2)
    assert out.shape == x.shape and out.dtype == x.dtype
    assert jnp.allclose(out, ref, atol=1e-5, rtol=1e-5)

    # 3) Forced two-pass tiled fallback (exercises hw tiling + tail masking).
    out2 = jax.block_until_ready(
        se_block(x, w1, b1, w2, b2, force_two_pass=True, hw_tile=128))
    assert jnp.allclose(out2, ref, atol=1e-5, rtol=1e-5)

    print("KERNEL_OK")
</pallas_src>

<mosaic_0001>
module attributes {stable_mosaic.version = 11 : i64} {
  func.func @_se_fused_kernel(%arg0: i32, %arg1: memref<1x4x256xf32, #tpu.memory_space<vmem>>, %arg2: memref<4x2xf32, #tpu.memory_space<vmem>>, %arg3: memref<1x2xf32, #tpu.memory_space<vmem>>, %arg4: memref<2x4xf32, #tpu.memory_space<vmem>>, %arg5: memref<1x4xf32, #tpu.memory_space<vmem>>, %arg6: memref<1x4x256xf32, #tpu.memory_space<vmem>>) attributes {dimension_semantics = [#tpu.dimension_semantics<parallel>], iteration_bounds = array<i64: 2>, scalar_prefetch = 0 : i64, scratch_operands = 0 : i64, tpu.core_type = #tpu.core_type<tc>, window_params = [{transform_indices = @transform_0, window_bounds = array<i64: 1, 4, 256>}, {pipeline_mode = #tpu.pipeline_mode<synchronous>, transform_indices = @transform_1, window_bounds = array<i64: 4, 2>}, {pipeline_mode = #tpu.pipeline_mode<synchronous>, transform_indices = @transform_2, window_bounds = array<i64: 1, 2>}, {pipeline_mode = #tpu.pipeline_mode<synchronous>, transform_indices = @transform_3, window_bounds = array<i64: 2, 4>}, {pipeline_mode = #tpu.pipeline_mode<synchronous>, transform_indices = @transform_4, window_bounds = array<i64: 1, 4>}, {transform_indices = @transform_5, window_bounds = array<i64: 1, 4, 256>}]} {
    %c0 = arith.constant 0 : index
    %c0_0 = arith.constant 0 : index
    %c0_1 = arith.constant 0 : index
    %0 = vector.load %arg1[%c0, %c0_0, %c0_1] : memref<1x4x256xf32, #tpu.memory_space<vmem>>, vector<1x4x256xf32>
    %cst = arith.constant dense<0.000000e+00> : vector<1x4xf32>
    %1 = vector.multi_reduction <add>, %0, %cst [2] : vector<1x4x256xf32> to vector<1x4xf32>
    %c0_2 = arith.constant 0 : index
    %c0_3 = arith.constant 0 : index
    %2 = vector.load %arg2[%c0_2, %c0_3] : memref<4x2xf32, #tpu.memory_space<vmem>>, vector<4x2xf32>
    %cst_4 = arith.constant dense<0.000000e+00> : vector<1x2xf32>
    %3 = tpu.matmul %1, %2, %cst_4 {dimension_numbers = #tpu.dot_dimension_numbers<[1], [0], [0], [1], [0, 0, 1, 1], [], []>} : vector<1x4xf32>, vector<4x2xf32>, vector<1x2xf32> -> vector<1x2xf32>
    %c0_5 = arith.constant 0 : index
    %c0_6 = arith.constant 0 : index
    %4 = vector.load %arg3[%c0_5, %c0_6] : memref<1x2xf32, #tpu.memory_space<vmem>>, vector<1x2xf32>
    %5 = arith.addf %3, %4 : vector<1x2xf32>
    %cst_7 = arith.constant 0.000000e+00 : f32
    %6 = vector.broadcast %cst_7 : f32 to vector<1x2xf32>
    %7 = arith.maximumf %5, %6 : vector<1x2xf32>
    %c0_8 = arith.constant 0 : index
    %c0_9 = arith.constant 0 : index
    %8 = vector.load %arg4[%c0_8, %c0_9] : memref<2x4xf32, #tpu.memory_space<vmem>>, vector<2x4xf32>
    %cst_10 = arith.constant dense<0.000000e+00> : vector<1x4xf32>
    %9 = tpu.matmul %7, %8, %cst_10 {dimension_numbers = #tpu.dot_dimension_numbers<[1], [0], [0], [1], [0, 0, 1, 1], [], []>} : vector<1x2xf32>, vector<2x4xf32>, vector<1x4xf32> -> vector<1x4xf32>
    %c0_11 = arith.constant 0 : index
    %c0_12 = arith.constant 0 : index
    %10 = vector.load %arg5[%c0_11, %c0_12] : memref<1x4xf32, #tpu.memory_space<vmem>>, vector<1x4xf32>
    %11 = arith.addf %9, %10 : vector<1x4xf32>
    %12 = arith.negf %11 : vector<1x4xf32>
    %13 = math.exp %12 : vector<1x4xf32>
    %cst_13 = arith.constant 1.000000e+00 : f32
    %14 = vector.broadcast %cst_13 : f32 to vector<1x4xf32>
    %15 = arith.addf %14, %13 : vector<1x4xf32>
    %16 = arith.divf %14, %15 : vector<1x4xf32>
    %17 = vector.shape_cast %16 : vector<1x4xf32> to vector<1x4x1xf32>
    %18 = vector.broadcast %17 : vector<1x4x1xf32> to vector<1x4x256xf32>
    %19 = arith.mulf %0, %18 : vector<1x4x256xf32>
    %c0_14 = arith.constant 0 : index
    %c0_15 = arith.constant 0 : index
    %c0_16 = arith.constant 0 : index
    %20 = vector.load %arg6[%c0_14, %c0_15, %c0_16] : memref<1x4x256xf32, #tpu.memory_space<vmem>>, vector<1x4x256xf32>
    tpu.vector_store %arg6[%c0_14, %c0_15, %c0_16], %19 {strides = array<i32>} : memref<1x4x256xf32, #tpu.memory_space<vmem>>, vector<1x4x256xf32>,
    return
  }
  func.func @transform_0(%arg0: i32) -> (i32, i32, i32) {
    %c0_i32 = arith.constant 0 : i32
    %c0_i32_0 = arith.constant 0 : i32
    %c0_i32_1 = arith.constant 0 : i32
    return %arg0, %c0_i32, %c0_i32_0 : i32, i32, i32
  }
  func.func @transform_1(%arg0: i32) -> (i32, i32) {
    %c0_i32 = arith.constant 0 : i32
    %c0_i32_0 = arith.constant 0 : i32
    %c0_i32_1 = arith.constant 0 : i32
    return %c0_i32, %c0_i32_0 : i32, i32
  }
  func.func @transform_2(%arg0: i32) -> (i32, i32) {
    %c0_i32 = arith.constant 0 : i32
    %c0_i32_0 = arith.constant 0 : i32
    %c0_i32_1 = arith.constant 0 : i32
    return %c0_i32, %c0_i32_0 : i32, i32
  }
  func.func @transform_3(%arg0: i32) -> (i32, i32) {
    %c0_i32 = arith.constant 0 : i32
    %c0_i32_0 = arith.constant 0 : i32
    %c0_i32_1 = arith.constant 0 : i32
    return %c0_i32, %c0_i32_0 : i32, i32
  }
  func.func @transform_4(%arg0: i32) -> (i32, i32) {
    %c0_i32 = arith.constant 0 : i32
    %c0_i32_0 = arith.constant 0 : i32
    %c0_i32_1 = arith.constant 0 : i32
    return %c0_i32, %c0_i32_0 : i32, i32
  }
  func.func @transform_5(%arg0: i32) -> (i32, i32, i32) {
    %c0_i32 = arith.constant 0 : i32
    %c0_i32_0 = arith.constant 0 : i32
    %c0_i32_1 = arith.constant 0 : i32
    return %arg0, %c0_i32, %c0_i32_0 : i32, i32, i32
  }
}

</mosaic_0001>

<llo_original>
// kernel: tpu_custom_call.1
$region0: #{tpu_custom_call.1}
  #allocation0 [shape = 'u32[]', space=smem, size = 0x4, offset = 0x4, fixed_abs, tag = 'smem constant byte address 0x4 - core index']
  #allocation1 [shape = 'u32[144,128]{1,0:T(1,128)}', space=vmem, size = 0x12000, scoped, tag = 'internal scratch']
  %s0 = inlined_call_operand.hbm [shape: f32[2,4,256], index: 0, kind: input, shape index: {}]
  %s1 = inlined_call_operand.vmem [shape: f32[4,2], index: 1, kind: input, shape index: {}]
  %s2 = inlined_call_operand.vmem [shape: f32[1,2], index: 2, kind: input, shape index: {}]
  %s3 = inlined_call_operand.vmem [shape: f32[2,4], index: 3, kind: input, shape index: {}]
  %s4 = inlined_call_operand.vmem [shape: f32[1,4], index: 4, kind: input, shape index: {}]
  %s5 = inlined_call_operand.hbm [shape: f32[2,4,256], index: 5, kind: output, shape index: {}]
  %s6 = sld [smem:[#allocation0]]
  $region57: #{tpu_custom_call.1} parent=0
    _
  %s8 = ssub.s32 1, %s6
  %s9 = scalar_select 0, %s8, %s6
  $region1: #{tpu_custom_call.1} parent=0
    #allocation2 [shape = 'u8[8192]{0}', space=vmem, size = 0x2000, scoped, tag = 'input window, operand 0']
    #allocation3 [shape = 's32[2]{0}', space=sflag, size = 0x8, scoped, tag = 'scoped memory for tpu_custom_call.1']
    #allocation4 [shape = 's32[2]{0}', space=sflag, size = 0x8, scoped, tag = 'scoped memory for tpu_custom_call.1']
    #allocation5 [shape = 'u8[8192]{0}', space=vmem, size = 0x2000, scoped, tag = 'output window, operand 0']
    %10 = vsyncpa [#allocation3], 0
    %s11 = scalar_lea.sflag [#allocation3], 1
    %12 = vsyncpa %s11, 0
    %13 = vsyncpa [#allocation4], 0
    %s14 = scalar_lea.sflag [#allocation4], 1
    %15 = vsyncpa %s14, 0
    loop: start=0, step=1, limit=4
    $region2: #{tpu_custom_call.1} parent=1 // loop_pre_header
      _
    $region3: #{tpu_custom_call.1} parent=1 // loop_header
      %s17 = sphi 0, %s21
      %p18 = scmp.ge.s32.totalorder %s17, 4
      %s27 = sphi 0, %s29
      %s30 = sphi 0, %s27
      %s31 = sphi 0, %s30
      %s47 = sphi 0, %s31
      %s51 = sphi 0, %s51
      %s53 = sphi 0, %s51
      %s54 = sphi 0, %s53
      %s68 = sphi 0, %s54
      %s72 = sphi 0, %s72
      %s74 = sphi 0, %s72
      %s75 = sphi 0, %s74
      %s89 = sphi 0, %s75
      %s93 = sphi 0, %s93
      %s95 = sphi 0, %s93
      %s96 = sphi 0, %s95
      %s110 = sphi 0, %s96
      %s114 = sphi 0, %s114
      %s116 = sphi 0, %s114
      %s117 = sphi 0, %s116
      %s131 = sphi 0, %s117
      %s137 = sphi 0, %s139
      %s140 = sphi 0, %s137
      %s141 = sphi 0, %s140
      %s157 = sphi 0, %s141
    $region4: #{tpu_custom_call.1} parent=1 // loop_header_branch
      %20 = sbr.rel (%p18) target = $region8
    $region5: #{tpu_custom_call.1} parent=1 // loop_body
      %s22 = ssub.s32 %s17, 1
      %s23 = ssub.s32 %s17, 2
      %s24 = sadd.s32 %s17, 1
      %s25 = ssub.s32 %s17, %s24
      %p26 = scmp.eq.s32.totalorder %s25, 0
      %s28 = sadd.s32 %s27, 1
      %s29 = scalar_select %p26, %s27, %s28
      %p32 = pneg %p26
      %p33 = scmp.eq.s32.totalorder %s17, 1
      %p34 = por %p32, %p33
      %p35 = scmp.ne.s32.totalorder %s27, %s30
      %p36 = scmp.eq.s32.totalorder %s17, 0
      %p37 = por %p35, %p36
      %p38 = scmp.ne.s32.totalorder %s27, %s30
      %p39 = scmp.eq.s32.totalorder %s22, 1
      %p40 = por %p38, %p39
      %p41 = scmp.ne.s32.totalorder %s30, %s31
      %p42 = scmp.eq.s32.totalorder %s22, 0
      %p43 = por %p41, %p42
      %p44 = scmp.ne.s32.totalorder %s30, %s31
      %p45 = scmp.eq.s32.totalorder %s23, 1
      %p46 = por %p44, %p45
      %p48 = scmp.ne.s32.totalorder %s31, %s47
      %p49 = scmp.eq.s32.totalorder %s23, 0
      %p50 = por %p48, %p49
      %s52 = sadd.s32 %s51, 1
      %p55 = scmp.eq.s32.totalorder %s17, 1
      %p56 = scmp.ne.s32.totalorder %s51, %s53
      %p57 = scmp.eq.s32.totalorder %s17, 0
      %p58 = por %p56, %p57
      %p59 = scmp.ne.s32.totalorder %s51, %s53
      %p60 = scmp.eq.s32.totalorder %s22, 1
      %p61 = por %p59, %p60
      %p62 = scmp.ne.s32.totalorder %s53, %s54
      %p63 = scmp.eq.s32.totalorder %s22, 0
      %p64 = por %p62, %p63
      %p65 = scmp.ne.s32.totalorder %s53, %s54
      %p66 = scmp.eq.s32.totalorder %s23, 1
      %p67 = por %p65, %p66
      %p69 = scmp.ne.s32.totalorder %s54, %s68
      %p70 = scmp.eq.s32.totalorder %s23, 0
      %p71 = por %p69, %p70
      %s73 = sadd.s32 %s72, 1
      %p76 = scmp.eq.s32.totalorder %s17, 1
      %p77 = scmp.ne.s32.totalorder %s72, %s74
      %p78 = scmp.eq.s32.totalorder %s17, 0
      %p79 = por %p77, %p78
      %p80 = scmp.ne.s32.totalorder %s72, %s74
      %p81 = scmp.eq.s32.totalorder %s22, 1
      %p82 = por %p80, %p81
      %p83 = scmp.ne.s32.totalorder %s74, %s75
      %p84 = scmp.eq.s32.totalorder %s22, 0
      %p85 = por %p83, %p84
      %p86 = scmp.ne.s32.totalorder %s74, %s75
      %p87 = scmp.eq.s32.totalorder %s23, 1
      %p88 = por %p86, %p87
      %p90 = scmp.ne.s32.totalorder %s75, %s89
      %p91 = scmp.eq.s32.totalorder %s23, 0
      %p92 = por %p90, %p91
      %s94 = sadd.s32 %s93, 1
      %p97 = scmp.eq.s32.totalorder %s17, 1
      %p98 = scmp.ne.s32.totalorder %s93, %s95
      %p99 = scmp.eq.s32.totalorder %s17, 0
      %p100 = por %p98, %p99
      %p101 = scmp.ne.s32.totalorder %s93, %s95
      %p102 = scmp.eq.s32.totalorder %s22, 1
      %p103 = por %p101, %p102
      %p104 = scmp.ne.s32.totalorder %s95, %s96
      %p105 = scmp.eq.s32.totalorder %s22, 0
      %p106 = por %p104, %p105
      %p107 = scmp.ne.s32.totalorder %s95, %s96
      %p108 = scmp.eq.s32.totalorder %s23, 1
      %p109 = por %p107, %p108
      %p111 = scmp.ne.s32.totalorder %s96, %s110
      %p112 = scmp.eq.s32.totalorder %s23, 0
      %p113 = por %p111, %p112
      %s115 = sadd.s32 %s114, 1
      %p118 = scmp.eq.s32.totalorder %s17, 1
      %p119 = scmp.ne.s32.totalorder %s114, %s116
      %p120 = scmp.eq.s32.totalorder %s17, 0
      %p121 = por %p119, %p120
      %p122 = scmp.ne.s32.totalorder %s114, %s116
      %p123 = scmp.eq.s32.totalorder %s22, 1
      %p124 = por %p122, %p123
      %p125 = scmp.ne.s32.totalorder %s116, %s117
      %p126 = scmp.eq.s32.totalorder %s22, 0
      %p127 = por %p125, %p126
      %p128 = scmp.ne.s32.totalorder %s116, %s117
      %p129 = scmp.eq.s32.totalorder %s23, 1
      %p130 = por %p128, %p129
      %p132 = scmp.ne.s32.totalorder %s117, %s131
      %p133 = scmp.eq.s32.totalorder %s23, 0
      %p134 = por %p132, %p133
      %s135 = ssub.s32 %s17, %s24
      %p136 = scmp.eq.s32.totalorder %s135, 0
      %s138 = sadd.s32 %s137, 1
      %s139 = scalar_select %p136, %s137, %s138
      %p142 = pneg %p136
      %p143 = scmp.eq.s32.totalorder %s17, 1
      %p144 = por %p142, %p143
      %p145 = scmp.ne.s32.totalorder %s137, %s140
      %p146 = scmp.eq.s32.totalorder %s17, 0
      %p147 = por %p145, %p146
      %p148 = scmp.ne.s32.totalorder %s137, %s140
      %p149 = scmp.eq.s32.totalorder %s22, 1
      %p150 = por %p148, %p149
      %p151 = scmp.ne.s32.totalorder %s140, %s141
      %p152 = scmp.eq.s32.totalorder %s22, 0
      %p153 = por %p151, %p152
      %p154 = scmp.ne.s32.totalorder %s140, %s141
      %p155 = scmp.eq.s32.totalorder %s23, 1
      %p156 = por %p154, %p155
      %p158 = scmp.ne.s32.totalorder %s141, %s157
      %p159 = scmp.eq.s32.totalorder %s23, 0
      %p160 = por %p158, %p159
      %p161 = scmp.le.s32.totalorder 1, %s17
      %p162 = scmp.lt.s32.totalorder %s17, 3
      %p163 = pnand %p161, %p162
      %p164 = pneg %p163
      // Predicated region
      $region9: #{tpu_custom_call.1} parent=5 // pred_check
        _
      $region10: #{tpu_custom_call.1} parent=5 // pred_check_branch
        %166 = sbr.rel (%p163) target = $region12
      $region11: #{tpu_custom_call.1} parent=5 // pred_region
        %s167 = ssub.s32 %s17, 1
        // Predicated region
        $region13: #{tpu_custom_call.1} parent=11 // pred_check
          %p168 = pneg %p64
        $region14: #{tpu_custom_call.1} parent=11 // pred_check_branch
          %170 = sbr.rel (%p168) target = $region16
        $region15: #{tpu_custom_call.1} parent=11 // pred_region
          _
        $region16: #{tpu_custom_call.1} parent=11 // pred_fallthru
          _
        // Predicated region
        $region17: #{tpu_custom_call.1} parent=11 // pred_check
          %p171 = pneg %p85
        $region18: #{tpu_custom_call.1} parent=11 // pred_check_branch
          %173 = sbr.rel (%p171) target = $region20
        $region19: #{tpu_custom_call.1} parent=11 // pred_region
          _
        $region20: #{tpu_custom_call.1} parent=11 // pred_fallthru
          _
        // Predicated region
        $region21: #{tpu_custom_call.1} parent=11 // pred_check
          %p174 = pneg %p106
        $region22: #{tpu_custom_call.1} parent=11 // pred_check_branch
          %176 = sbr.rel (%p174) target = $region24
        $region23: #{tpu_custom_call.1} parent=11 // pred_region
          _
        $region24: #{tpu_custom_call.1} parent=11 // pred_fallthru
          _
        // Predicated region
        $region25: #{tpu_custom_call.1} parent=11 // pred_check
          %p177 = pneg %p127
        $region26: #{tpu_custom_call.1} parent=11 // pred_check_branch
          %179 = sbr.rel (%p177) target = $region28
        $region27: #{tpu_custom_call.1} parent=11 // pred_region
          _
        $region28: #{tpu_custom_call.1} parent=11 // pred_fallthru
          _
      $region12: #{tpu_custom_call.1} parent=5 // pred_fallthru
        _
      %p180 = scmp.lt.s32.totalorder %s17, 2
      // Predicated region
      $region29: #{tpu_custom_call.1} parent=5 // pred_check
        %p181 = pneg %p180
      $region30: #{tpu_custom_call.1} parent=5 // pred_check_branch
        %183 = sbr.rel (%p181) target = $region32
      $region31: #{tpu_custom_call.1} parent=5 // pred_region
        // Predicated region
        $region33: #{tpu_custom_call.1} parent=31 // pred_check
          %p184 = pneg %p37
        $region34: #{tpu_custom_call.1} parent=31 // pred_check_branch
          %186 = sbr.rel (%p184) target = $region36
        $region35: #{tpu_custom_call.1} parent=31 // pred_region
          %s187 = sand.u32 %s27, 1
          %s188 = scalar_lea.sflag [#allocation3], %s187
          %s189 = sand.u32 %s27, 1
          %s190 = smul.addr %s189, 8
          %s191 = scalar_lea.vmem [#allocation2], %s190
          %s193 = ssub.s32 128, 128
          %194 = vsyncadd %s188, %s193
          %s195 = smul.addr %s17, 2
          %s196 = smul.addr %s195, 64
          %s197 = scalar_lea.hbm %s0, %s196
          %s199 = sshll.u32 %s191, 4
          %s200 = int_to_ptr.vmem [resolvable:$true] %s199
          %202 = dma.hbm_to_vmem [thread:$0]  %s197, 128, %s200, %s188
        $region36: #{tpu_custom_call.1} parent=31 // pred_fallthru
          _
      $region32: #{tpu_custom_call.1} parent=5 // pred_fallthru
        _
      %p203 = scmp.le.s32.totalorder 1, %s17
      %p204 = scmp.lt.s32.totalorder %s17, 3
      %p205 = pnand %p203, %p204
      %p206 = pneg %p205
      // Predicated region
      $region37: #{tpu_custom_call.1} parent=5 // pred_check
        _
      $region38: #{tpu_custom_call.1} parent=5 // pred_check_branch
        %208 = sbr.rel (%p205) target = $region40
      $region39: #{tpu_custom_call.1} parent=5 // pred_region
        %s209 = ssub.s32 %s17, 1
        %s210 = sand.u32 %s30, 1
        %s211 = scalar_lea.sflag [#allocation3], %s210
        %s212 = sand.u32 %s30, 1
        %s213 = smul.addr %s212, 8
        %s214 = scalar_lea.vmem [#allocation2], %s213
        // Predicated region
        $region41: #{tpu_custom_call.1} parent=39 // pred_check
          %p215 = pneg %p43
        $region42: #{tpu_custom_call.1} parent=39 // pred_check_branch
          %217 = sbr.rel (%p215) target = $region44
        $region43: #{tpu_custom_call.1} parent=39 // pred_region
          %218 = dma.done %s211, 128
        $region44: #{tpu_custom_call.1} parent=39 // pred_fallthru
          _
        %s219 = sand.u32 %s30, 1
        %s220 = scalar_lea.sflag [#allocation3], %s219
        %s221 = sand.u32 %s30, 1
        %s222 = smul.addr %s221, 8
        %s223 = scalar_lea.vmem [#allocation2], %s222
        %p224 = pneg %p43
        %p225 = pneg %p40
        %p226 = pneg %p64
        %p227 = pneg %p61
        %p228 = pneg %p85
        %p229 = pneg %p82
        %p230 = pneg %p106
        %p231 = pneg %p103
        %p232 = pneg %p127
        %p233 = pneg %p124
        %p234 = pneg %p153
        %p235 = pneg %p150
        %s236 = sand.u32 %s140, 1
        %s237 = scalar_lea.sflag [#allocation4], %s236
        %s238 = sand.u32 %s140, 1
        %s239 = smul.addr %s238, 8
        %s240 = scalar_lea.vmem [#allocation5], %s239
        %v241 = vld [vmem:[%s214] sm:$0xff]
        %v243 = vcombine.high %v241, %v241
        %vm245 = vcmask 1043456
        %v246 = vsel %vm245, %v241, 0.0
        %v247 = vsel %vm245, %v243, 0.0
        %v248 = vadd.f32 %v246, %v247
        %249 = vadd.xlane.f32.xlu0 %v248
        %v250 = vpop.xlane.xlu0 %249
        %v251 = vld [vmem:[%s1] sm:$0xf]
        %v252 = vld [vmem:[%s2] sm:$0x1]
        %v254 = vlaneseq
        %v255 = vand.u32 %v254, 127
        %v256 = vlaneseq
        %v257 = vshrl.u32 %v256, 7
        %v258 = vsub.s32 %v255, %v257
        %v259 = vrot.slane %v250, %v258
        %vm260 = vcmask 31744
        %v261 = vsel %vm260, %v259, 0
        %v264 = vsel %vm245, %v251, 0
        %266 = vmatprep.subr.mxu0 0.0
        %267 = vmatpush1.msra.mxu0 %v264
        %268 = vmatprep.subr.mxu0 0.0
        %269 = vmatpush1.msra.mxu0 0.0
        %270 = vmatprep.subr.mxu0 0.0
        %271 = vmatpush1.msra.mxu0 0.0
        %272 = vmatprep.subr.mxu0 0.0
        %273 = vmatpush1.msra.mxu0 0.0
        %274 = vmatprep.subr.mxu0 0.0
        %275 = vmatpush1.msra.mxu0 0.0
        %276 = vmatprep.subr.mxu0 0.0
        %277 = vmatpush1.msra.mxu0 0.0
        %278 = vmatprep.subr.mxu0 0.0
        %279 = vmatpush1.msra.mxu0 0.0
        %280 = vmatprep.subr.mxu0 0.0
        %281 = vmatpush1.msra.mxu0 0.0
        %282 = vmatprep.subr.mxu0 0.0
        %283 = vmatpush1.msra.mxu0 0.0
        %284 = vmatprep.subr.mxu0 0.0
        %285 = vmatpush1.msra.mxu0 0.0
        %286 = vmatprep.subr.mxu0 0.0
        %287 = vmatpush1.msra.mxu0 0.0
        %288 = vmatprep.subr.mxu0 0.0
        %289 = vmatpush1.msra.mxu0 0.0
        %290 = vmatprep.subr.mxu0 0.0
        %291 = vmatpush1.msra.mxu0 0.0
        %292 = vmatprep.subr.mxu0 0.0
        %293 = vmatpush1.msra.mxu0 0.0
        %294 = vmatprep.subr.mxu0 0.0
        %295 = vmatpush1.msra.mxu0 0.0
        %296 = vmatprep.subr.mxu0 0.0
        %297 = vmatpush1.msra.mxu0 0.0
        %298 = vmatprep.subr.mxu0 0.0
        %299 = vmatpush1.msra.mxu0 0.0
        %300 = vmatprep.subr.mxu0 0.0
        %301 = vmatpush1.msra.mxu0 0.0
        %302 = vmatprep.subr.mxu0 0.0
        %303 = vmatpush1.msra.mxu0 0.0
        %304 = vmatprep.subr.mxu0 0.0
        %305 = vmatpush1.msra.mxu0 0.0
        %306 = vmatprep.subr.mxu0 0.0
        %307 = vmatpush1.msra.mxu0 0.0
        %308 = vmatprep.subr.mxu0 0.0
        %309 = vmatpush1.msra.mxu0 0.0
        %310 = vmatprep.subr.mxu0 0.0
        %311 = vmatpush1.msra.mxu0 0.0
        %312 = vmatprep.subr.mxu0 0.0
        %313 = vmatpush1.msra.mxu0 0.0
        %314 = vmatprep.subr.mxu0 0.0
        %315 = vmatpush1.msra.mxu0 0.0
        %316 = vmatprep.subr.mxu0 0.0
        %317 = vmatpush1.msra.mxu0 0.0
        %318 = vmatprep.subr.mxu0 0.0
        %319 = vmatpush1.msra.mxu0 0.0
        %320 = vmatprep.subr.mxu0 0.0
        %321 = vmatpush1.msra.mxu0 0.0
        %322 = vmatprep.subr.mxu0 0.0
        %323 = vmatpush1.msra.mxu0 0.0
        %324 = vmatprep.subr.mxu0 0.0
        %325 = vmatpush1.msra.mxu0 0.0
        %326 = vmatprep.subr.mxu0 0.0
        %327 = vmatpush1.msra.mxu0 0.0
        %328 = vmatprep.subr.mxu0 0.0
        %329 = vmatpush1.msra.mxu0 0.0
        %330 = vmatprep.mubr.f32.mxu0 0.0
        %331 = vmatmul.mubr.f32.gmra.mrb[0].mxu0 %v261
        %v332 = vpop.f32.mrb[0].mxu0
        %v333 = vadd.f32 %v252, %v332
        %v334 = vpop.f32.mrb[0].mxu0
        %335 = vdwg.mxu0
        %v336 = vmax.f32 %v333, 0.0
        %v337 = vld [vmem:[%s3] sm:$0x3]
        %v338 = vld [vmem:[%s4] sm:$0x1]
        %vm339 = vcmask 15360
        %v341 = vsel %vm339, %v336, 0
        %vm343 = vcmask 1041408
        %v345 = vsel %vm343, %v337, 0
        %347 = vmatprep.subr.mxu0 0.0
        %348 = vmatpush1.msra.mxu0 %v345
        %349 = vmatprep.subr.mxu0 0.0
        %350 = vmatpush1.msra.mxu0 0.0
        %351 = vmatprep.subr.mxu0 0.0
        %352 = vmatpush1.msra.mxu0 0.0
        %353 = vmatprep.subr.mxu0 0.0
        %354 = vmatpush1.msra.mxu0 0.0
        %355 = vmatprep.subr.mxu0 0.0
        %356 = vmatpush1.msra.mxu0 0.0
        %357 = vmatprep.subr.mxu0 0.0
        %358 = vmatpush1.msra.mxu0 0.0
        %359 = vmatprep.subr.mxu0 0.0
        %360 = vmatpush1.msra.mxu0 0.0
        %361 = vmatprep.subr.mxu0 0.0
        %362 = vmatpush1.msra.mxu0 0.0
        %363 = vmatprep.subr.mxu0 0.0
        %364 = vmatpush1.msra.mxu0 0.0
        %365 = vmatprep.subr.mxu0 0.0
        %366 = vmatpush1.msra.mxu0 0.0
        %367 = vmatprep.subr.mxu0 0.0
        %368 = vmatpush1.msra.mxu0 0.0
        %369 = vmatprep.subr.mxu0 0.0
        %370 = vmatpush1.msra.mxu0 0.0
        %371 = vmatprep.subr.mxu0 0.0
        %372 = vmatpush1.msra.mxu0 0.0
        %373 = vmatprep.subr.mxu0 0.0
        %374 = vmatpush1.msra.mxu0 0.0
        %375 = vmatprep.subr.mxu0 0.0
        %376 = vmatpush1.msra.mxu0 0.0
        %377 = vmatprep.subr.mxu0 0.0
        %378 = vmatpush1.msra.mxu0 0.0
        %379 = vmatprep.subr.mxu0 0.0
        %380 = vmatpush1.msra.mxu0 0.0
        %381 = vmatprep.subr.mxu0 0.0
        %382 = vmatpush1.msra.mxu0 0.0
        %383 = vmatprep.subr.mxu0 0.0
        %384 = vmatpush1.msra.mxu0 0.0
        %385 = vmatprep.subr.mxu0 0.0
        %386 = vmatpush1.msra.mxu0 0.0
        %387 = vmatprep.subr.mxu0 0.0
        %388 = vmatpush1.msra.mxu0 0.0
        %389 = vmatprep.subr.mxu0 0.0
        %390 = vmatpush1.msra.mxu0 0.0
        %391 = vmatprep.subr.mxu0 0.0
        %392 = vmatpush1.msra.mxu0 0.0
        %393 = vmatprep.subr.mxu0 0.0
        %394 = vmatpush1.msra.mxu0 0.0
        %395 = vmatprep.subr.mxu0 0.0
        %396 = vmatpush1.msra.mxu0 0.0
        %397 = vmatprep.subr.mxu0 0.0
        %398 = vmatpush1.msra.mxu0 0.0
        %399 = vmatprep.subr.mxu0 0.0
        %400 = vmatpush1.msra.mxu0 0.0
        %401 = vmatprep.subr.mxu0 0.0
        %402 = vmatpush1.msra.mxu0 0.0
        %403 = vmatprep.subr.mxu0 0.0
        %404 = vmatpush1.msra.mxu0 0.0
        %405 = vmatprep.subr.mxu0 0.0
        %406 = vmatpush1.msra.mxu0 0.0
        %407 = vmatprep.subr.mxu0 0.0
        %408 = vmatpush1.msra.mxu0 0.0
        %409 = vmatprep.subr.mxu0 0.0
        %410 = vmatpush1.msra.mxu0 0.0
        %411 = vmatprep.mubr.f32.mxu0 0.0
        %412 = vmatmul.mubr.f32.gmra.mrb[0].mxu0 %v341
        %v413 = vpop.f32.mrb[0].mxu0
        %v414 = vadd.f32 %v338, %v413
        %v415 = vpop.f32.mrb[0].mxu0
        %416 = vdwg.mxu0
        %v417 = vxor.u32 %v414, 2147483648
        %v418 = vmul.f32 %v417, 1.442695
        %v419 = vpow.pop %v418
        %v420 = vadd.f32 %v419, 1.0
        %v421 = vrcp.pop %v420
        %v422 = vmul.f32 1.0, %v421
        %v423 = vlaneseq
        %v424 = vshrl.u32 %v423, 7
        %v425 = vsub.s32 0, %v424
        %v426 = vrot.slane %v422, %v425
        %428 = vbcast.lane.b32.xlu0 %v426, 256
        %v429 = vpop.permute.xlu0 %428
        %v432 = vunpack.c.l.s4 839922192
        %v433 = vunpack.c.0.s8 %v432
        %v434 = vlaneseq
        %v435 = vshrl.u32 %v434, 7
        %v436 = vsub.s32 %v433, %v435
        %v437 = vrot.slane %v429, %v436
        %v439 = vmul.f32 %v241, %v437
        %440 = vst [vmem:[%s240] sm:$0xff] %v439
        %s441 = sand.u32 %s140, 1
        %s442 = scalar_lea.sflag [#allocation4], %s441
        %s443 = sand.u32 %s140, 1
        %s444 = smul.addr %s443, 8
        %s445 = scalar_lea.vmem [#allocation5], %s444
        // Predicated region
        $region45: #{tpu_custom_call.1} parent=39 // pred_check
          %p446 = pneg %p150
        $region46: #{tpu_custom_call.1} parent=39 // pred_check_branch
          %448 = sbr.rel (%p446) target = $region48
        $region47: #{tpu_custom_call.1} parent=39 // pred_region
          %s450 = ssub.s32 128, 128
          %451 = vsyncadd %s442, %s450
          %s452 = smul.addr %s22, 2
          %s453 = smul.addr %s452, 64
          %s454 = scalar_lea.hbm %s5, %s453
          %s456 = sshll.u32 %s445, 4
          %s457 = int_to_ptr.vmem [resolvable:$true] %s456
          %459 = dma.vmem_to_hbm [thread:$0]  %s457, 128, %s454, %s442
        $region48: #{tpu_custom_call.1} parent=39 // pred_fallthru
          _
      $region40: #{tpu_custom_call.1} parent=5 // pred_fallthru
        _
      %p460 = scmp.le.s32.totalorder 2, %s17
      // Predicated region
      $region49: #{tpu_custom_call.1} parent=5 // pred_check
        %p461 = pneg %p460
      $region50: #{tpu_custom_call.1} parent=5 // pred_check_branch
        %463 = sbr.rel (%p461) target = $region52
      $region51: #{tpu_custom_call.1} parent=5 // pred_region
        %s464 = ssub.s32 %s17, 2
        // Predicated region
        $region53: #{tpu_custom_call.1} parent=51 // pred_check
          %p465 = pneg %p156
        $region54: #{tpu_custom_call.1} parent=51 // pred_check_branch
          %467 = sbr.rel (%p465) target = $region56
        $region55: #{tpu_custom_call.1} parent=51 // pred_region
          %s468 = sand.u32 %s141, 1
          %s469 = scalar_lea.sflag [#allocation4], %s468
          %s470 = sand.u32 %s141, 1
          %s471 = smul.addr %s470, 8
          %s472 = scalar_lea.vmem [#allocation5], %s471
          %473 = dma.done %s469, 128
        $region56: #{tpu_custom_call.1} parent=51 // pred_fallthru
          _
      $region52: #{tpu_custom_call.1} parent=5 // pred_fallthru
        _
    $region6: #{tpu_custom_call.1} parent=1 // loop_footer
      %s21 = sadd.s32 1, %s17
    $region7: #{tpu_custom_call.1} parent=1 // loop_footer_branch
      %16 = sbr.rel target = $region3
    $region8: #{tpu_custom_call.1} parent=1 // loop_exit
      _
    %474 = vsyncpa [#allocation3], 1
    %s475 = scalar_lea.sflag [#allocation3], 1
    %476 = vsyncpa %s475, 1
    %477 = vsyncpa [#allocation4], 1
    %s478 = scalar_lea.sflag [#allocation4], 1
    %479 = vsyncpa %s478, 1

</llo_original>
